<compile_context>
chip_gen: v5e
topology: v5e:2x2
jax: 0.10.0
libtpu: 0.0.40
codegen_flags: <defaults>
</compile_context>

<pallas_src>
import functools

import jax
import jax.numpy as jnp
import numpy as np
from jax.experimental import pallas as pl
from jax.experimental.pallas import tpu as pltpu

_MB = 1024 * 1024


def _mynli_srl_kernel(last_ref, p_ref, h_ref, w_top_ref, w_fold_ref, b_ref,
                      out_ref, acc_last_ref, acc_srl_ref, *, inv_l):
    # last_ref : (b_blk, l_blk,  bert)   activation block (any float dtype)
    # p_ref    : (b_blk, lp_blk, 400)    premise SRL block
    # h_ref    : (b_blk, lh_blk, 400)    hypothesis SRL block
    # w_top    : (bert, C_pad)           W_cls[:bert]              (zero-padded classes)
    # w_fold   : (400,  C_pad)           W_srl @ W_cls[bert:]      (zero-padded classes)
    # b_ref    : (1,    C_pad)           b_srl @ W_cls[bert:] + b_cls
    # out_ref  : (b_blk, C_pad)          lane-dense logits block (resident across seq axis)
    # acc_*    : f32 VMEM accumulators, persistent across the sequence grid axis
    s = pl.program_id(1)

    @pl.when(s == 0)
    def _():
        acc_last_ref[...] = jnp.zeros_like(acc_last_ref)
        acc_srl_ref[...] = jnp.zeros_like(acc_srl_ref)

    # streaming sums over the sequence chunk (zero padding contributes nothing)
    acc_last_ref[...] += jnp.sum(last_ref[...].astype(jnp.float32), axis=1)
    acc_srl_ref[...] += (jnp.sum(p_ref[...].astype(jnp.float32), axis=1)
                         + jnp.sum(h_ref[...].astype(jnp.float32), axis=1))

    @pl.when(s == pl.num_programs(1) - 1)
    def _():
        pooled_last = acc_last_ref[...] * inv_l                       # (b_blk, bert)
        pooled_srl = acc_srl_ref[...] * inv_l                         # (b_blk, 400)
        logits = (jnp.dot(pooled_last, w_top_ref[...],
                          preferred_element_type=jnp.float32)
                  + jnp.dot(pooled_srl, w_fold_ref[...],
                            preferred_element_type=jnp.float32)
                  + b_ref[...])                                       # (b_blk, C_pad)
        out_ref[...] = logits.astype(out_ref.dtype)


def _tpu_budget():
    """Generation-aware (activation VMEM budget, vmem_limit_bytes, is_v7x)."""
    kind = ""
    try:
        kind = jax.devices()[0].device_kind.lower()
    except Exception:
        pass
    if "v2" in kind or "v3" in kind:
        return 8 * _MB, None, False          # tiny VMEM; leave compiler default alone
    if "v5" in kind:
        return 12 * _MB, 16 * _MB, False     # stay within v5e's default scoped limit
    if "v7" in kind:
        return 40 * _MB, 48 * _MB, True      # 64 MiB physical, 2 TensorCores
    if "v6" in kind:
        return 56 * _MB, 64 * _MB, False     # 128 MiB physical, 1 TensorCore
    if "v4" in kind:
        return 24 * _MB, 32 * _MB, False
    return 20 * _MB, 28 * _MB, False         # unknown: conservative


def mynli_srl_forward(last_hidden, p_srl_hiddens, h_srl_hiddens,
                      p_parser_output, h_parser_output, p_mask, h_mask,
                      params, *, batch_block=None, seq_blocks=None):
    """SRL branch of MyNLI.forward. Parser outputs / masks are unused (as in PyTorch)."""
    del p_parser_output, h_parser_output, p_mask, h_mask  # unused in SRL branch

    w_srl = params["w_srl"]            # (400, srl_dim)
    b_srl = params["b_srl"]            # (srl_dim,)
    w_cls = params["w_cls"]            # (bert + srl_dim, class_num)
    b_cls = params["b_cls"]            # (class_num,)

    B, L, bert = last_hidden.shape
    _, Lp, srl_in = p_srl_hiddens.shape
    _, Lh, srl_in_h = h_srl_hiddens.shape
    assert srl_in == srl_in_h
    assert Lp + Lh == L, "last_hidden seq length must equal Lp + Lh"
    srl_dim = w_srl.shape[1]
    class_num = w_cls.shape[1]
    assert w_cls.shape[0] == bert + srl_dim

    # ---- fold weights once (tiny XLA matmuls, outside the hot kernel, f32) ----
    w_top = w_cls[:bert, :].astype(jnp.float32)                        # (bert, C)
    w_bot = w_cls[bert:, :].astype(jnp.float32)                        # (srl_dim, C)
    w_fold = w_srl.astype(jnp.float32) @ w_bot                         # (400, C)
    b_fold = (b_srl.reshape(1, srl_dim).astype(jnp.float32) @ w_bot
              + b_cls.reshape(1, class_num).astype(jnp.float32))       # (1, C)

    # ---- lane-dense output: pad class dim to a multiple of 128 ----
    c_pad = 128 * pl.cdiv(class_num, 128)
    pad_c = c_pad - class_num
    w_top_p = jnp.pad(w_top, ((0, 0), (0, pad_c)))
    w_fold_p = jnp.pad(w_fold, ((0, 0), (0, pad_c)))
    b_p = jnp.pad(b_fold, ((0, 0), (0, pad_c)))

    # ---- generation-aware tiling ----
    budget, vmem_limit, is_v7 = _tpu_budget()

    bert_lanes = 128 * pl.cdiv(bert, 128)          # lane padding in VMEM
    srl_lanes = 128 * pl.cdiv(srl_in, 128)         # 400 -> 512
    act_item = max(jnp.dtype(last_hidden.dtype).itemsize,
                   jnp.dtype(p_srl_hiddens.dtype).itemsize,
                   jnp.dtype(h_srl_hiddens.dtype).itemsize)

    # resident weights / bias (count double-buffered to be safe)
    weight_bytes = 2 * 4 * (bert * c_pad + srl_in * c_pad + 8 * c_pad)
    usable = max(budget - weight_bytes - 1 * _MB, 2 * _MB)

    def _row_bytes(l_b, lp_b, lh_b):
        act = act_item * (l_b * bert_lanes + (lp_b + lh_b) * srl_lanes)
        extra = 4 * (2 * c_pad + bert_lanes + srl_lanes)   # out block bufs + acc scratch
        return act + extra

    def _seq_blocks_shapes(gs):
        l_b = L if gs == 1 else 8 * pl.cdiv(pl.cdiv(L, gs), 8)
        lp_b = Lp if gs == 1 else 8 * pl.cdiv(pl.cdiv(Lp, gs), 8)
        lh_b = Lh if gs == 1 else 8 * pl.cdiv(pl.cdiv(Lh, gs), 8)
        return l_b, lp_b, lh_b

    rows_needed = B if B <= 8 else 8

    if seq_blocks is not None:
        grid_s = max(1, int(seq_blocks))
    else:
        grid_s = 1
        while True:
            l_b, lp_b, lh_b = _seq_blocks_shapes(grid_s)
            if 2 * rows_needed * _row_bytes(l_b, lp_b, lh_b) <= usable:
                break
            if l_b <= 8 and lp_b <= 8 and lh_b <= 8:
                break                                    # can't split further; best effort
            grid_s += 1
    l_blk, lp_blk, lh_blk = _seq_blocks_shapes(grid_s)

    cap_rows = max(1, usable // (2 * _row_bytes(l_blk, lp_blk, lh_blk)))

    if batch_block is not None:
        b_blk = max(1, int(batch_block))
        if b_blk > B:
            b_blk = B
    else:
        # Single-TC chips (v5e/v6e): grid is a serial loop, take the biggest block.
        # v7x: keep >= 2 batch blocks only when each can still be >= 8 rows.
        desired = pl.cdiv(B, 2) if (is_v7 and B >= 16) else B
        b_blk = min(desired, int(cap_rows))
        if b_blk >= B:
            b_blk = B                                    # one block == full batch (valid shape)
        else:
            b_blk = max(8, (b_blk // 8) * 8)             # 8-aligned sublane-dense blocks
    grid_b = pl.cdiv(B, b_blk)
    B_pad = grid_b * b_blk

    L_pad = grid_s * l_blk
    Lp_pad = grid_s * lp_blk
    Lh_pad = grid_s * lh_blk

    def _pad3(x, b_target, s_target):
        pb = b_target - x.shape[0]
        ps = s_target - x.shape[1]
        if pb or ps:
            x = jnp.pad(x, ((0, pb), (0, ps), (0, 0)))
        return x

    last_p = _pad3(last_hidden, B_pad, L_pad)
    p_p = _pad3(p_srl_hiddens, B_pad, Lp_pad)
    h_p = _pad3(h_srl_hiddens, B_pad, Lh_pad)

    # ---- scheduler hint: this kernel is pure HBM streaming ----
    bytes_accessed = (act_item * (B_pad * L_pad * bert
                                  + B_pad * (Lp_pad + Lh_pad) * srl_in)
                      + 4 * ((bert + srl_in + 1) * c_pad + B_pad * c_pad))
    flops = (B_pad * (L_pad * bert + (Lp_pad + Lh_pad) * srl_in)          # sums
             + 2 * B_pad * (bert + srl_in) * c_pad)                       # folded classifier
    cost = pl.CostEstimate(flops=int(flops), transcendentals=0,
                           bytes_accessed=int(bytes_accessed))

    compiler_kwargs = dict(dimension_semantics=("parallel", "arbitrary"))
    if vmem_limit is not None:
        compiler_kwargs["vmem_limit_bytes"] = int(vmem_limit)

    kernel = functools.partial(_mynli_srl_kernel, inv_l=1.0 / float(L))

    out_pad = pl.pallas_call(
        kernel,
        out_shape=jax.ShapeDtypeStruct((B_pad, c_pad), jnp.float32),
        grid_spec=pltpu.PrefetchScalarGridSpec(
            num_scalar_prefetch=0,
            grid=(grid_b, grid_s),
            in_specs=[
                pl.BlockSpec((b_blk, l_blk, bert), lambda b, s: (b, s, 0)),
                pl.BlockSpec((b_blk, lp_blk, srl_in), lambda b, s: (b, s, 0)),
                pl.BlockSpec((b_blk, lh_blk, srl_in), lambda b, s: (b, s, 0)),
                pl.BlockSpec((bert, c_pad), lambda b, s: (0, 0)),      # resident
                pl.BlockSpec((srl_in, c_pad), lambda b, s: (0, 0)),    # resident
                pl.BlockSpec((1, c_pad), lambda b, s: (0, 0)),         # resident
            ],
            out_specs=pl.BlockSpec((b_blk, c_pad), lambda b, s: (b, 0)),
            scratch_shapes=[
                pltpu.VMEM((b_blk, bert), jnp.float32),
                pltpu.VMEM((b_blk, srl_in), jnp.float32),
            ],
        ),
        compiler_params=pltpu.CompilerParams(**compiler_kwargs),
        cost_estimate=cost,
    )(last_p, p_p, h_p, w_top_p, w_fold_p, b_p)

    return out_pad[:B, :class_num]


def mynli_srl_reference(last_hidden, p_srl, h_srl, params):
    """Pure-JAX reference mirroring the PyTorch SRL branch (un-collapsed math)."""
    srl = jnp.concatenate([p_srl, h_srl], axis=1)
    srl = srl @ params["w_srl"] + params["b_srl"]
    ch = jnp.concatenate([last_hidden, srl], axis=-1)           # (B, L, D)
    pooled = jnp.mean(ch, axis=1)                               # transpose + avg_pool1d
    return pooled @ params["w_cls"] + params["b_cls"]


def _run_case(key, B, Lp, Lh, BERT, SRL_DIM, CLASS_NUM, **kwargs):
    SRL_IN = 400
    L = Lp + Lh
    keys = jax.random.split(key, 8)
    last_hidden = jax.random.normal(keys[0], (B, L, BERT), dtype=jnp.float32)
    p_srl_hiddens = jax.random.normal(keys[1], (B, Lp, SRL_IN), dtype=jnp.float32)
    h_srl_hiddens = jax.random.normal(keys[2], (B, Lh, SRL_IN), dtype=jnp.float32)
    # unused in the SRL branch but part of the forward signature:
    p_parser_output = jax.random.normal(keys[3], (B, Lp + 1, 768), dtype=jnp.float32)
    h_parser_output = jax.random.normal(keys[4], (B, Lh + 1, 768), dtype=jnp.float32)
    p_mask = jnp.ones((B, Lp), dtype=jnp.float32)
    h_mask = jnp.ones((B, Lh), dtype=jnp.float32)

    params = {
        "w_srl": 0.02 * jax.random.normal(keys[5], (SRL_IN, SRL_DIM), dtype=jnp.float32),
        "b_srl": 0.01 * jnp.arange(SRL_DIM, dtype=jnp.float32),
        "w_cls": 0.02 * jax.random.normal(keys[6], (BERT + SRL_DIM, CLASS_NUM),
                                          dtype=jnp.float32),
        "b_cls": 0.01 * jnp.arange(CLASS_NUM, dtype=jnp.float32),
    }

    logits = mynli_srl_forward(last_hidden, p_srl_hiddens, h_srl_hiddens,
                               p_parser_output, h_parser_output, p_mask, h_mask,
                               params, **kwargs)
    logits = jax.block_until_ready(logits)
    ref = mynli_srl_reference(last_hidden, p_srl_hiddens, h_srl_hiddens, params)
    np.testing.assert_allclose(np.asarray(logits), np.asarray(ref),
                               rtol=1e-4, atol=1e-4)


if __name__ == "__main__":
    key = jax.random.PRNGKey(0)
    k1, k2 = jax.random.split(key)

    # Case 1: small shapes, auto tiling (single full-batch block, grid_s = 1).
    _run_case(k1, B=2, Lp=8, Lh=8, BERT=128, SRL_DIM=64, CLASS_NUM=3)

    # Case 2: exercise the padded / tiled paths (batch padded to a multiple of 8,
    # sequence axis split across two "arbitrary" grid steps with VMEM accumulation).
    _run_case(k2, B=10, Lp=24, Lh=16, BERT=128, SRL_DIM=64, CLASS_NUM=3,
              batch_block=8, seq_blocks=2)

    print("KERNEL_OK")
</pallas_src>

<mosaic_0001>
module attributes {stable_mosaic.version = 11 : i64} {
  func.func @_mynli_srl_kernel(%arg0: i32, %arg1: i32, %arg2: memref<2x16x128xf32, #tpu.memory_space<vmem>>, %arg3: memref<2x8x400xf32, #tpu.memory_space<vmem>>, %arg4: memref<2x8x400xf32, #tpu.memory_space<vmem>>, %arg5: memref<128x128xf32, #tpu.memory_space<vmem>>, %arg6: memref<400x128xf32, #tpu.memory_space<vmem>>, %arg7: memref<1x128xf32, #tpu.memory_space<vmem>>, %arg8: memref<2x128xf32, #tpu.memory_space<vmem>>, %arg9: memref<2x128xf32, #tpu.memory_space<vmem>>, %arg10: memref<2x400xf32, #tpu.memory_space<vmem>>) attributes {dimension_semantics = [#tpu.dimension_semantics<parallel>, #tpu.dimension_semantics<arbitrary>], iteration_bounds = array<i64: 1, 1>, scalar_prefetch = 0 : i64, scratch_operands = 2 : i64, tpu.core_type = #tpu.core_type<tc>, window_params = [{transform_indices = @transform_0, window_bounds = array<i64: 2, 16, 128>}, {transform_indices = @transform_1, window_bounds = array<i64: 2, 8, 400>}, {transform_indices = @transform_2, window_bounds = array<i64: 2, 8, 400>}, {pipeline_mode = #tpu.pipeline_mode<synchronous>, transform_indices = @transform_3, window_bounds = array<i64: 128, 128>}, {pipeline_mode = #tpu.pipeline_mode<synchronous>, transform_indices = @transform_4, window_bounds = array<i64: 400, 128>}, {pipeline_mode = #tpu.pipeline_mode<synchronous>, transform_indices = @transform_5, window_bounds = array<i64: 1, 128>}, {transform_indices = @transform_6, window_bounds = array<i64: 2, 128>}]} {
    %c0_i32 = arith.constant 0 : i32
    %0 = arith.cmpi eq, %arg1, %c0_i32 : i32
    %1 = arith.extui %0 : i1 to i32
    %c0_i32_0 = arith.constant 0 : i32
    %2 = arith.cmpi ne, %1, %c0_i32_0 : i32
    scf.if %2 {
      %cst_21 = arith.constant 0.000000e+00 : f32
      %19 = vector.broadcast %cst_21 : f32 to vector<2x128xf32>
      %c0_22 = arith.constant 0 : index
      %c0_23 = arith.constant 0 : index
      %20 = vector.load %arg9[%c0_22, %c0_23] : memref<2x128xf32, #tpu.memory_space<vmem>>, vector<2x128xf32>
      tpu.vector_store %arg9[%c0_22, %c0_23], %19 {strides = array<i32>} : memref<2x128xf32, #tpu.memory_space<vmem>>, vector<2x128xf32>,
      %cst_24 = arith.constant 0.000000e+00 : f32
      %21 = vector.broadcast %cst_24 : f32 to vector<2x400xf32>
      %c0_25 = arith.constant 0 : index
      %c0_26 = arith.constant 0 : index
      %22 = vector.load %arg10[%c0_25, %c0_26] : memref<2x400xf32, #tpu.memory_space<vmem>>, vector<2x400xf32>
      tpu.vector_store %arg10[%c0_25, %c0_26], %21 {strides = array<i32>} : memref<2x400xf32, #tpu.memory_space<vmem>>, vector<2x400xf32>,
    } else {
    }
    %c0 = arith.constant 0 : index
    %c0_1 = arith.constant 0 : index
    %3 = vector.load %arg9[%c0, %c0_1] : memref<2x128xf32, #tpu.memory_space<vmem>>, vector<2x128xf32>
    %c0_2 = arith.constant 0 : index
    %c0_3 = arith.constant 0 : index
    %c0_4 = arith.constant 0 : index
    %4 = vector.load %arg2[%c0_2, %c0_3, %c0_4] : memref<2x16x128xf32, #tpu.memory_space<vmem>>, vector<2x16x128xf32>
    %cst = arith.constant dense<0.000000e+00> : vector<2x128xf32>
    %5 = vector.multi_reduction <add>, %4, %cst [1] : vector<2x16x128xf32> to vector<2x128xf32>
    %6 = arith.addf %3, %5 : vector<2x128xf32>
    %c0_5 = arith.constant 0 : index
    %c0_6 = arith.constant 0 : index
    %7 = vector.load %arg9[%c0_5, %c0_6] : memref<2x128xf32, #tpu.memory_space<vmem>>, vector<2x128xf32>
    tpu.vector_store %arg9[%c0_5, %c0_6], %6 {strides = array<i32>} : memref<2x128xf32, #tpu.memory_space<vmem>>, vector<2x128xf32>,
    %c0_7 = arith.constant 0 : index
    %c0_8 = arith.constant 0 : index
    %8 = vector.load %arg10[%c0_7, %c0_8] : memref<2x400xf32, #tpu.memory_space<vmem>>, vector<2x400xf32>
    %c0_9 = arith.constant 0 : index
    %c0_10 = arith.constant 0 : index
    %c0_11 = arith.constant 0 : index
    %9 = vector.load %arg3[%c0_9, %c0_10, %c0_11] : memref<2x8x400xf32, #tpu.memory_space<vmem>>, vector<2x8x400xf32>
    %cst_12 = arith.constant dense<0.000000e+00> : vector<2x400xf32>
    %10 = vector.multi_reduction <add>, %9, %cst_12 [1] : vector<2x8x400xf32> to vector<2x400xf32>
    %c0_13 = arith.constant 0 : index
    %c0_14 = arith.constant 0 : index
    %c0_15 = arith.constant 0 : index
    %11 = vector.load %arg4[%c0_13, %c0_14, %c0_15] : memref<2x8x400xf32, #tpu.memory_space<vmem>>, vector<2x8x400xf32>
    %cst_16 = arith.constant dense<0.000000e+00> : vector<2x400xf32>
    %12 = vector.multi_reduction <add>, %11, %cst_16 [1] : vector<2x8x400xf32> to vector<2x400xf32>
    %13 = arith.addf %10, %12 : vector<2x400xf32>
    %14 = arith.addf %8, %13 : vector<2x400xf32>
    %c0_17 = arith.constant 0 : index
    %c0_18 = arith.constant 0 : index
    %15 = vector.load %arg10[%c0_17, %c0_18] : memref<2x400xf32, #tpu.memory_space<vmem>>, vector<2x400xf32>
    tpu.vector_store %arg10[%c0_17, %c0_18], %14 {strides = array<i32>} : memref<2x400xf32, #tpu.memory_space<vmem>>, vector<2x400xf32>,
    %c0_i32_19 = arith.constant 0 : i32
    %16 = arith.cmpi eq, %arg1, %c0_i32_19 : i32
    %17 = arith.extui %16 : i1 to i32
    %c0_i32_20 = arith.constant 0 : i32
    %18 = arith.cmpi ne, %17, %c0_i32_20 : i32
    scf.if %18 {
      %c0_21 = arith.constant 0 : index
      %c0_22 = arith.constant 0 : index
      %19 = vector.load %arg9[%c0_21, %c0_22] : memref<2x128xf32, #tpu.memory_space<vmem>>, vector<2x128xf32>
      %cst_23 = arith.constant 6.250000e-02 : f32
      %20 = vector.broadcast %cst_23 : f32 to vector<2x128xf32>
      %21 = arith.mulf %19, %20 : vector<2x128xf32>
      %c0_24 = arith.constant 0 : index
      %c0_25 = arith.constant 0 : index
      %22 = vector.load %arg10[%c0_24, %c0_25] : memref<2x400xf32, #tpu.memory_space<vmem>>, vector<2x400xf32>
      %cst_26 = arith.constant 6.250000e-02 : f32
      %23 = vector.broadcast %cst_26 : f32 to vector<2x400xf32>
      %24 = arith.mulf %22, %23 : vector<2x400xf32>
      %c0_27 = arith.constant 0 : index
      %c0_28 = arith.constant 0 : index
      %25 = vector.load %arg5[%c0_27, %c0_28] : memref<128x128xf32, #tpu.memory_space<vmem>>, vector<128x128xf32>
      %cst_29 = arith.constant dense<0.000000e+00> : vector<2x128xf32>
      %26 = tpu.matmul %21, %25, %cst_29 {dimension_numbers = #tpu.dot_dimension_numbers<[1], [0], [0], [1], [0, 0, 1, 1], [], []>} : vector<2x128xf32>, vector<128x128xf32>, vector<2x128xf32> -> vector<2x128xf32>
      %c0_30 = arith.constant 0 : index
      %c0_31 = arith.constant 0 : index
      %27 = vector.load %arg6[%c0_30, %c0_31] : memref<400x128xf32, #tpu.memory_space<vmem>>, vector<400x128xf32>
      %cst_32 = arith.constant dense<0.000000e+00> : vector<2x128xf32>
      %28 = tpu.matmul %24, %27, %cst_32 {dimension_numbers = #tpu.dot_dimension_numbers<[1], [0], [0], [1], [0, 0, 1, 1], [], []>} : vector<2x400xf32>, vector<400x128xf32>, vector<2x128xf32> -> vector<2x128xf32>
      %29 = arith.addf %26, %28 : vector<2x128xf32>
      %c0_33 = arith.constant 0 : index
      %c0_34 = arith.constant 0 : index
      %30 = vector.load %arg7[%c0_33, %c0_34] : memref<1x128xf32, #tpu.memory_space<vmem>>, vector<1x128xf32>
      %31 = vector.broadcast %30 : vector<1x128xf32> to vector<2x128xf32>
      %32 = arith.addf %29, %31 : vector<2x128xf32>
      %c0_35 = arith.constant 0 : index
      %c0_36 = arith.constant 0 : index
      %33 = vector.load %arg8[%c0_35, %c0_36] : memref<2x128xf32, #tpu.memory_space<vmem>>, vector<2x128xf32>
      tpu.vector_store %arg8[%c0_35, %c0_36], %32 {strides = array<i32>} : memref<2x128xf32, #tpu.memory_space<vmem>>, vector<2x128xf32>,
    } else {
    }
    return
  }
  func.func @transform_0(%arg0: i32, %arg1: i32) -> (i32, i32, i32) {
    %c0_i32 = arith.constant 0 : i32
    %c0_i32_0 = arith.constant 0 : i32
    return %arg0, %arg1, %c0_i32 : i32, i32, i32
  }
  func.func @transform_1(%arg0: i32, %arg1: i32) -> (i32, i32, i32) {
    %c0_i32 = arith.constant 0 : i32
    %c0_i32_0 = arith.constant 0 : i32
    return %arg0, %arg1, %c0_i32 : i32, i32, i32
  }
  func.func @transform_2(%arg0: i32, %arg1: i32) -> (i32, i32, i32) {
    %c0_i32 = arith.constant 0 : i32
    %c0_i32_0 = arith.constant 0 : i32
    return %arg0, %arg1, %c0_i32 : i32, i32, i32
  }
  func.func @transform_3(%arg0: i32, %arg1: i32) -> (i32, i32) {
    %c0_i32 = arith.constant 0 : i32
    %c0_i32_0 = arith.constant 0 : i32
    %c0_i32_1 = arith.constant 0 : i32
    return %c0_i32, %c0_i32_0 : i32, i32
  }
  func.func @transform_4(%arg0: i32, %arg1: i32) -> (i32, i32) {
    %c0_i32 = arith.constant 0 : i32
    %c0_i32_0 = arith.constant 0 : i32
    %c0_i32_1 = arith.constant 0 : i32
    return %c0_i32, %c0_i32_0 : i32, i32
  }
  func.func @transform_5(%arg0: i32, %arg1: i32) -> (i32, i32) {
    %c0_i32 = arith.constant 0 : i32
    %c0_i32_0 = arith.constant 0 : i32
    %c0_i32_1 = arith.constant 0 : i32
    return %c0_i32, %c0_i32_0 : i32, i32
  }
  func.func @transform_6(%arg0: i32, %arg1: i32) -> (i32, i32) {
    %c0_i32 = arith.constant 0 : i32
    %c0_i32_0 = arith.constant 0 : i32
    return %arg0, %c0_i32 : i32, i32
  }
}

</mosaic_0001>

<llo_original>
// kernel: tpu_custom_call.1
$region0: #{tpu_custom_call.1}
  #allocation0 [shape = 'u32[]', space=smem, size = 0x4, offset = 0x4, fixed_abs, tag = 'smem constant byte address 0x4 - core index']
  #allocation1 [shape = 'u32[72,128]{1,0:T(1,128)}', space=vmem, size = 0x9000, scoped, tag = 'internal scratch']
  #allocation2 [shape = 'f32[2,128]{1,0:T(2,128)}', space=vmem, size = 0x400, scoped, tag = 'scratch operand']
  #allocation3 [shape = 'f32[2,400]{1,0:T(2,128)}', space=vmem, size = 0x1000, scoped, tag = 'scratch operand']
  %s0 = inlined_call_operand.hbm [shape: f32[2,16,128], index: 0, kind: input, shape index: {}]
  %s1 = inlined_call_operand.hbm [shape: f32[2,8,400], index: 1, kind: input, shape index: {}]
  %s2 = inlined_call_operand.hbm [shape: f32[2,8,400], index: 2, kind: input, shape index: {}]
  %s3 = inlined_call_operand.hbm [shape: f32[128,128], index: 3, kind: input, shape index: {}]
  %s4 = inlined_call_operand.hbm [shape: f32[400,128], index: 4, kind: input, shape index: {}]
  %s5 = inlined_call_operand.vmem [shape: f32[1,128], index: 5, kind: input, shape index: {}]
  %s6 = inlined_call_operand.hbm [shape: f32[2,128], index: 6, kind: output, shape index: {}]
  %s7 = sld [smem:[#allocation0]]
  $region62: #{tpu_custom_call.1} parent=0
    _
  %s9 = ssub.s32 1, %s7
  %s10 = scalar_select 0, %s9, %s7
  $region1: #{tpu_custom_call.1} parent=0
    #allocation4 [shape = 'u8[16384]{0}', space=vmem, size = 0x4000, scoped, tag = 'input window, operand 0, single buffered']
    #allocation5 [shape = 's32[1]{0}', space=sflag, size = 0x4, scoped, tag = 'scoped memory for tpu_custom_call.1']
    #allocation6 [shape = 's32[1]{0}', space=sflag, size = 0x4, scoped, tag = 'scoped memory for tpu_custom_call.1']
    #allocation7 [shape = 'u8[32768]{0}', space=vmem, size = 0x8000, scoped, tag = 'input window, operand 1, single buffered']
    #allocation8 [shape = 's32[1]{0}', space=sflag, size = 0x4, scoped, tag = 'scoped memory for tpu_custom_call.1']
    #allocation9 [shape = 'u8[32768]{0}', space=vmem, size = 0x8000, scoped, tag = 'input window, operand 2, single buffered']
    #allocation10 [shape = 'u8[65536]{0}', space=vmem, size = 0x10000, scoped, tag = 'input window, operand 3, single buffered']
    #allocation11 [shape = 's32[1]{0}', space=sflag, size = 0x4, scoped, tag = 'scoped memory for tpu_custom_call.1']
    #allocation12 [shape = 'u8[204800]{0}', space=vmem, size = 0x32000, scoped, tag = 'input window, operand 4, single buffered']
    #allocation13 [shape = 'u8[1024]{0}', space=vmem, size = 0x400, scoped, tag = 'output window, operand 0, single buffered']
    %11 = vsyncpa [#allocation5], 0
    %12 = vsyncpa [#allocation8], 0
    %13 = vsyncpa [#allocation11], 0
    %14 = vsyncpa [#allocation6], 0
    // Predicated region
    $region2: #{tpu_custom_call.1} parent=1 // pred_check
      _
    $region3: #{tpu_custom_call.1} parent=1 // pred_check_branch
      %16 = sbr.rel (0) target = $region5
    $region4: #{tpu_custom_call.1} parent=1 // pred_region
      %18 = vsyncadd [#allocation5], 0
      %s19 = sshll.u32 %s0, 4
      %s20 = int_to_ptr.hbm [resolvable:$true] %s19
      %s21 = sshll.u32 [#allocation4], 4
      %s22 = int_to_ptr.vmem [resolvable:$true] %s21
      %27 = dma.hbm_to_vmem [thread:$0]  %s20, 512, %s22, [#allocation5], 128, 128, 8
    $region5: #{tpu_custom_call.1} parent=1 // pred_fallthru
      _
    // Predicated region
    $region6: #{tpu_custom_call.1} parent=1 // pred_check
      _
    $region7: #{tpu_custom_call.1} parent=1 // pred_check_branch
      %29 = sbr.rel (0) target = $region9
    $region8: #{tpu_custom_call.1} parent=1 // pred_region
      %31 = vsyncadd [#allocation8], 0
      %s32 = sshll.u32 %s1, 4
      %s33 = int_to_ptr.hbm [resolvable:$true] %s32
      %s34 = sshll.u32 [#allocation7], 4
      %s35 = int_to_ptr.vmem [resolvable:$true] %s34
      %40 = dma.hbm_to_vmem [thread:$0]  %s33, 1024, %s35, [#allocation8], 512, 512, 32
    $region9: #{tpu_custom_call.1} parent=1 // pred_fallthru
      _
    // Predicated region
    $region10: #{tpu_custom_call.1} parent=1 // pred_check
      _
    $region11: #{tpu_custom_call.1} parent=1 // pred_check_branch
      %42 = sbr.rel (0) target = $region13
    $region12: #{tpu_custom_call.1} parent=1 // pred_region
      %44 = vsyncadd [#allocation8], 0
      %s45 = sshll.u32 %s2, 4
      %s46 = int_to_ptr.hbm [resolvable:$true] %s45
      %s47 = sshll.u32 [#allocation9], 4
      %s48 = int_to_ptr.vmem [resolvable:$true] %s47
      %53 = dma.hbm_to_vmem [thread:$0]  %s46, 1024, %s48, [#allocation8], 512, 512, 32
    $region13: #{tpu_custom_call.1} parent=1 // pred_fallthru
      _
    // Predicated region
    $region14: #{tpu_custom_call.1} parent=1 // pred_check
      _
    $region15: #{tpu_custom_call.1} parent=1 // pred_check_branch
      %55 = sbr.rel (0) target = $region17
    $region16: #{tpu_custom_call.1} parent=1 // pred_region
      %57 = vsyncadd [#allocation11], 0
      %s58 = sshll.u32 %s3, 4
      %s59 = int_to_ptr.hbm [resolvable:$true] %s58
      %s60 = sshll.u32 [#allocation10], 4
      %s61 = int_to_ptr.vmem [resolvable:$true] %s60
      %66 = dma.hbm_to_vmem [thread:$0]  %s59, 2048, %s61, [#allocation11], 128, 128, 8
    $region17: #{tpu_custom_call.1} parent=1 // pred_fallthru
      _
    // Predicated region
    $region18: #{tpu_custom_call.1} parent=1 // pred_check
      _
    $region19: #{tpu_custom_call.1} parent=1 // pred_check_branch
      %68 = sbr.rel (0) target = $region21
    $region20: #{tpu_custom_call.1} parent=1 // pred_region
      %70 = vsyncadd [#allocation11], 0
      %s71 = sshll.u32 %s4, 4
      %s72 = int_to_ptr.hbm [resolvable:$true] %s71
      %s73 = sshll.u32 [#allocation12], 4
      %s74 = int_to_ptr.vmem [resolvable:$true] %s73
      %79 = dma.hbm_to_vmem [thread:$0]  %s72, 6400, %s74, [#allocation11], 128, 128, 8
    $region21: #{tpu_custom_call.1} parent=1 // pred_fallthru
      _
    // Predicated region
    $region22: #{tpu_custom_call.1} parent=1 // pred_check
      _
    $region23: #{tpu_custom_call.1} parent=1 // pred_check_branch
      %81 = sbr.rel (0) target = $region25
    $region24: #{tpu_custom_call.1} parent=1 // pred_region
      _
    $region25: #{tpu_custom_call.1} parent=1 // pred_fallthru
      _
    // Predicated region
    $region26: #{tpu_custom_call.1} parent=1 // pred_check
      _
    $region27: #{tpu_custom_call.1} parent=1 // pred_check_branch
      %83 = sbr.rel (0) target = $region29
    $region28: #{tpu_custom_call.1} parent=1 // pred_region
      %85 = dma.done [#allocation5], 512
    $region29: #{tpu_custom_call.1} parent=1 // pred_fallthru
      _
    // Predicated region
    $region30: #{tpu_custom_call.1} parent=1 // pred_check
      _
    $region31: #{tpu_custom_call.1} parent=1 // pred_check_branch
      %87 = sbr.rel (0) target = $region33
    $region32: #{tpu_custom_call.1} parent=1 // pred_region
      %89 = dma.done [#allocation8], 1024
    $region33: #{tpu_custom_call.1} parent=1 // pred_fallthru
      _
    // Predicated region
    $region34: #{tpu_custom_call.1} parent=1 // pred_check
      _
    $region35: #{tpu_custom_call.1} parent=1 // pred_check_branch
      %91 = sbr.rel (0) target = $region37
    $region36: #{tpu_custom_call.1} parent=1 // pred_region
      %93 = dma.done [#allocation8], 1024
    $region37: #{tpu_custom_call.1} parent=1 // pred_fallthru
      _
    // Predicated region
    $region38: #{tpu_custom_call.1} parent=1 // pred_check
      _
    $region39: #{tpu_custom_call.1} parent=1 // pred_check_branch
      %95 = sbr.rel (0) target = $region41
    $region40: #{tpu_custom_call.1} parent=1 // pred_region
      %97 = dma.done [#allocation11], 2048
    $region41: #{tpu_custom_call.1} parent=1 // pred_fallthru
      _
    // Predicated region
    $region42: #{tpu_custom_call.1} parent=1 // pred_check
      _
    $region43: #{tpu_custom_call.1} parent=1 // pred_check_branch
      %99 = sbr.rel (0) target = $region45
    $region44: #{tpu_custom_call.1} parent=1 // pred_region
      %101 = dma.done [#allocation11], 6400
    $region45: #{tpu_custom_call.1} parent=1 // pred_fallthru
      _
    %p102 = scmp.eq.s32.totalorder 0, 0
    // Predicated region
    $region46: #{tpu_custom_call.1} parent=1 // pred_check
      %p103 = pneg %p102
    $region47: #{tpu_custom_call.1} parent=1 // pred_check_branch
      %105 = sbr.rel (%p103) target = $region49
    $region48: #{tpu_custom_call.1} parent=1 // pred_region
      %106 = vst [vmem:[#allocation2] sm:$0x3] 0.0
      %vm107 = vcmask 1041408
      %vm108 = vcmask 1043458
      %vm109 = vmor %vm108, %vm107
      %vm110 = vcmask 1045508
      %vm111 = vmor %vm110, %vm109
      %vm112 = vcmask 130054
      %vm113 = vmor %vm112, %vm111
      %114 = vst.msk [vmem:[#allocation3] sm:$0xff] %vm113, 0.0
    $region49: #{tpu_custom_call.1} parent=1 // pred_fallthru
      _
    %v115 = vld [vmem:[#allocation2] sm:$0x3]
    %v116 = vld [vmem:[#allocation4] sm:$0xff]
    %v117 = vld [vmem:[#allocation4 + $0x8] sm:$0xff]
    %v118 = vld [vmem:[#allocation4 + $0x10] sm:$0xff]
    %v119 = vld [vmem:[#allocation4 + $0x18] sm:$0xff]
    %v120 = vadd.f32 %v116, %v117
    %v121 = vrot.slane %v120, 4
    %v122 = vadd.f32 %v120, %v121
    %v123 = vrot.slane %v122, 2
    %v124 = vadd.f32 %v122, %v123
    %v125 = vrot.slane %v124, 1
    %v126 = vadd.f32 %v124, %v125
    %v127 = vadd.f32 %v118, %v119
    %v128 = vrot.slane %v127, 4
    %v129 = vadd.f32 %v127, %v128
    %v130 = vrot.slane %v129, 2
    %v131 = vadd.f32 %v129, %v130
    %v132 = vrot.slane %v131, 1
    %v133 = vadd.f32 %v131, %v132
    %vm136 = vcmask 1041409
    %v137 = vsel %vm136, %v133, %v126
    %v139 = vadd.f32 %v115, %v137
    %140 = vst [vmem:[#allocation2] sm:$0x3] %v139
    %v141 = vld [vmem:[#allocation3] sm:$0xff]
    %v142 = vld [vmem:[#allocation7] sm:$0xff]
    %v143 = vld [vmem:[#allocation7 + $0x8] sm:$0xff]
    %v144 = vld [vmem:[#allocation7 + $0x10] sm:$0xff]
    %v145 = vld [vmem:[#allocation7 + $0x18] sm:$0xff]
    %v146 = vld [vmem:[#allocation7 + $0x20] sm:$0xff]
    %v147 = vld [vmem:[#allocation7 + $0x28] sm:$0xff]
    %v148 = vld [vmem:[#allocation7 + $0x30] sm:$0xff]
    %v149 = vld [vmem:[#allocation7 + $0x38] sm:$0xff]
    %v150 = vrot.slane %v142, 4
    %v151 = vadd.f32 %v142, %v150
    %v152 = vrot.slane %v151, 2
    %v153 = vadd.f32 %v151, %v152
    %v154 = vrot.slane %v153, 1
    %v155 = vadd.f32 %v153, %v154
    %v156 = vrot.slane %v143, 4
    %v157 = vadd.f32 %v143, %v156
    %v158 = vrot.slane %v157, 2
    %v159 = vadd.f32 %v157, %v158
    %v160 = vrot.slane %v159, 1
    %v161 = vadd.f32 %v159, %v160
    %v162 = vrot.slane %v144, 4
    %v163 = vadd.f32 %v144, %v162
    %v164 = vrot.slane %v163, 2
    %v165 = vadd.f32 %v163, %v164
    %v166 = vrot.slane %v165, 1
    %v167 = vadd.f32 %v165, %v166
    %vm168 = vcmask 130048
    %v169 = vsel %vm168, %v145, 0.0
    %v170 = vrot.slane %v169, 4
    %v171 = vadd.f32 %v169, %v170
    %v172 = vrot.slane %v171, 2
    %v173 = vadd.f32 %v171, %v172
    %v174 = vrot.slane %v173, 1
    %v175 = vadd.f32 %v173, %v174
    %v176 = vrot.slane %v146, 4
    %v177 = vadd.f32 %v146, %v176
    %v178 = vrot.slane %v177, 2
    %v179 = vadd.f32 %v177, %v178
    %v180 = vrot.slane %v179, 1
    %v181 = vadd.f32 %v179, %v180
    %v182 = vrot.slane %v147, 4
    %v183 = vadd.f32 %v147, %v182
    %v184 = vrot.slane %v183, 2
    %v185 = vadd.f32 %v183, %v184
    %v186 = vrot.slane %v185, 1
    %v187 = vadd.f32 %v185, %v186
    %v188 = vrot.slane %v148, 4
    %v189 = vadd.f32 %v148, %v188
    %v190 = vrot.slane %v189, 2
    %v191 = vadd.f32 %v189, %v190
    %v192 = vrot.slane %v191, 1
    %v193 = vadd.f32 %v191, %v192
    %v194 = vsel %vm168, %v149, 0.0
    %v195 = vrot.slane %v194, 4
    %v196 = vadd.f32 %v194, %v195
    %v197 = vrot.slane %v196, 2
    %v198 = vadd.f32 %v196, %v197
    %v199 = vrot.slane %v198, 1
    %v200 = vadd.f32 %v198, %v199
    %v201 = vld [vmem:[#allocation9] sm:$0xff]
    %v202 = vld [vmem:[#allocation9 + $0x8] sm:$0xff]
    %v203 = vld [vmem:[#allocation9 + $0x10] sm:$0xff]
    %v204 = vld [vmem:[#allocation9 + $0x18] sm:$0xff]
    %v205 = vld [vmem:[#allocation9 + $0x20] sm:$0xff]
    %v206 = vld [vmem:[#allocation9 + $0x28] sm:$0xff]
    %v207 = vld [vmem:[#allocation9 + $0x30] sm:$0xff]
    %v208 = vld [vmem:[#allocation9 + $0x38] sm:$0xff]
    %v209 = vrot.slane %v201, 4
    %v210 = vadd.f32 %v201, %v209
    %v211 = vrot.slane %v210, 2
    %v212 = vadd.f32 %v210, %v211
    %v213 = vrot.slane %v212, 1
    %v214 = vadd.f32 %v212, %v213
    %v215 = vrot.slane %v202, 4
    %v216 = vadd.f32 %v202, %v215
    %v217 = vrot.slane %v216, 2
    %v218 = vadd.f32 %v216, %v217
    %v219 = vrot.slane %v218, 1
    %v220 = vadd.f32 %v218, %v219
    %v221 = vrot.slane %v203, 4
    %v222 = vadd.f32 %v203, %v221
    %v223 = vrot.slane %v222, 2
    %v224 = vadd.f32 %v222, %v223
    %v225 = vrot.slane %v224, 1
    %v226 = vadd.f32 %v224, %v225
    %v227 = vsel %vm168, %v204, 0.0
    %v228 = vrot.slane %v227, 4
    %v229 = vadd.f32 %v227, %v228
    %v230 = vrot.slane %v229, 2
    %v231 = vadd.f32 %v229, %v230
    %v232 = vrot.slane %v231, 1
    %v233 = vadd.f32 %v231, %v232
    %v234 = vrot.slane %v205, 4
    %v235 = vadd.f32 %v205, %v234
    %v236 = vrot.slane %v235, 2
    %v237 = vadd.f32 %v235, %v236
    %v238 = vrot.slane %v237, 1
    %v239 = vadd.f32 %v237, %v238
    %v240 = vrot.slane %v206, 4
    %v241 = vadd.f32 %v206, %v240
    %v242 = vrot.slane %v241, 2
    %v243 = vadd.f32 %v241, %v242
    %v244 = vrot.slane %v243, 1
    %v245 = vadd.f32 %v243, %v244
    %v246 = vrot.slane %v207, 4
    %v247 = vadd.f32 %v207, %v246
    %v248 = vrot.slane %v247, 2
    %v249 = vadd.f32 %v247, %v248
    %v250 = vrot.slane %v249, 1
    %v251 = vadd.f32 %v249, %v250
    %v252 = vsel %vm168, %v208, 0.0
    %v253 = vrot.slane %v252, 4
    %v254 = vadd.f32 %v252, %v253
    %v255 = vrot.slane %v254, 2
    %v256 = vadd.f32 %v254, %v255
    %v257 = vrot.slane %v256, 1
    %v258 = vadd.f32 %v256, %v257
    %v259 = vadd.f32 %v155, %v214
    %v260 = vadd.f32 %v161, %v220
    %v261 = vadd.f32 %v167, %v226
    %v262 = vadd.f32 %v175, %v233
    %v263 = vadd.f32 %v181, %v239
    %v264 = vadd.f32 %v187, %v245
    %v265 = vadd.f32 %v193, %v251
    %v266 = vadd.f32 %v200, %v258
    %v275 = vrot.slane %v260, 6
    %v276 = vrot.slane %v261, 4
    %v277 = vrot.slane %v262, 2
    %v278 = vrot.slane %v264, 6
    %v279 = vrot.slane %v265, 4
    %v280 = vrot.slane %v266, 2
    %vm281 = vcmask 1041408
    %v282 = vsel %vm281, %v259, %v275
    %vm283 = vcmask 1045508
    %v284 = vsel %vm283, %v276, %v277
    %vm285 = vcmask 1043456
    %v286 = vsel %vm285, %v282, %v284
    %v287 = vsel %vm281, %v263, %v278
    %v288 = vsel %vm283, %v279, %v280
    %v289 = vsel %vm285, %v287, %v288
    %vm290 = vcmask 1044484
    %v291 = vsel %vm290, %v286, %v286
    %vm292 = vcmask 1046534
    %v293 = vsel %vm292, %v286, %v291
    %v294 = vrot.slane %v289, 7
    %v295 = vsel %vm136, %v294, %v293
    %vm296 = vcmask 1043459
    %v297 = vsel %vm296, %v294, %v295
    %vm298 = vcmask 1045509
    %v299 = vsel %vm298, %v294, %v297
    %vm300 = vcmask 1047559
    %v301 = vsel %vm300, %v294, %v299
    %v303 = vadd.f32 %v141, %v301
    %vm304 = vcmask 1043458
    %vm305 = vmor %vm304, %vm281
    %vm306 = vmor %vm283, %vm305
    %vm307 = vcmask 130054
    %vm308 = vmor %vm307, %vm306
    %309 = vst.msk [vmem:[#allocation3] sm:$0xff] %vm308, %v303
    // Predicated region
    $region50: #{tpu_custom_call.1} parent=1 // pred_check
      %p310 = pneg %p102
    $region51: #{tpu_custom_call.1} parent=1 // pred_check_branch
      %312 = sbr.rel (%p310) target = $region53
    $region52: #{tpu_custom_call.1} parent=1 // pred_region
      %v313 = vld [vmem:[#allocation2] sm:$0x3]
      %v314 = vmul.f32 %v313, 0.0625
      %v315 = vld [vmem:[#allocation3] sm:$0xff]
      %v316 = vmul.f32 %v315, 0.0625
      %v317 = vld [vmem:[#allocation10] sm:$0xff]
      %v318 = vld [vmem:[#allocation10 + $0x8] sm:$0xff]
      %v319 = vld [vmem:[#allocation10 + $0x10] sm:$0xff]
      %v320 = vld [vmem:[#allocation10 + $0x18] sm:$0xff]
      %v321 = vld [vmem:[#allocation10 + $0x20] sm:$0xff]
      %v322 = vld [vmem:[#allocation10 + $0x28] sm:$0xff]
      %v323 = vld [vmem:[#allocation10 + $0x30] sm:$0xff]
      %v324 = vld [vmem:[#allocation10 + $0x38] sm:$0xff]
      %v325 = vld [vmem:[#allocation10 + $0x40] sm:$0xff]
      %v326 = vld [vmem:[#allocation10 + $0x48] sm:$0xff]
      %v327 = vld [vmem:[#allocation10 + $0x50] sm:$0xff]
      %v328 = vld [vmem:[#allocation10 + $0x58] sm:$0xff]
      %v329 = vld [vmem:[#allocation10 + $0x60] sm:$0xff]
      %v330 = vld [vmem:[#allocation10 + $0x68] sm:$0xff]
      %v331 = vld [vmem:[#allocation10 + $0x70] sm:$0xff]
      %v332 = vld [vmem:[#allocation10 + $0x78] sm:$0xff]
      %v333 = vld [vmem:[#allocation12] sm:$0xff]
      %v334 = vld [vmem:[#allocation12 + $0x8] sm:$0xff]
      %v335 = vld [vmem:[#allocation12 + $0x10] sm:$0xff]
      %v336 = vld [vmem:[#allocation12 + $0x18] sm:$0xff]
      %v337 = vld [vmem:[#allocation12 + $0x20] sm:$0xff]
      %v338 = vld [vmem:[#allocation12 + $0x28] sm:$0xff]
      %v339 = vld [vmem:[#allocation12 + $0x30] sm:$0xff]
      %v340 = vld [vmem:[#allocation12 + $0x38] sm:$0xff]
      %v341 = vld [vmem:[#allocation12 + $0x40] sm:$0xff]
      %v342 = vld [vmem:[#allocation12 + $0x48] sm:$0xff]
      %v343 = vld [vmem:[#allocation12 + $0x50] sm:$0xff]
      %v344 = vld [vmem:[#allocation12 + $0x58] sm:$0xff]
      %v345 = vld [vmem:[#allocation12 + $0x60] sm:$0xff]
      %v346 = vld [vmem:[#allocation12 + $0x68] sm:$0xff]
      %v347 = vld [vmem:[#allocation12 + $0x70] sm:$0xff]
      %v348 = vld [vmem:[#allocation12 + $0x78] sm:$0xff]
      %v349 = vld [vmem:[#allocation12 + $0x80] sm:$0xff]
      %v350 = vld [vmem:[#allocation12 + $0x88] sm:$0xff]
      %v351 = vld [vmem:[#allocation12 + $0x90] sm:$0xff]
      %v352 = vld [vmem:[#allocation12 + $0x98] sm:$0xff]
      %v353 = vld [vmem:[#allocation12 + $0xa0] sm:$0xff]
      %v354 = vld [vmem:[#allocation12 + $0xa8] sm:$0xff]
      %v355 = vld [vmem:[#allocation12 + $0xb0] sm:$0xff]
      %v356 = vld [vmem:[#allocation12 + $0xb8] sm:$0xff]
      %v357 = vld [vmem:[#allocation12 + $0xc0] sm:$0xff]
      %v358 = vld [vmem:[#allocation12 + $0xc8] sm:$0xff]
      %v359 = vld [vmem:[#allocation12 + $0xd0] sm:$0xff]
      %v360 = vld [vmem:[#allocation12 + $0xd8] sm:$0xff]
      %v361 = vld [vmem:[#allocation12 + $0xe0] sm:$0xff]
      %v362 = vld [vmem:[#allocation12 + $0xe8] sm:$0xff]
      %v363 = vld [vmem:[#allocation12 + $0xf0] sm:$0xff]
      %v364 = vld [vmem:[#allocation12 + $0xf8] sm:$0xff]
      %v365 = vld [vmem:[#allocation12 + $0x100] sm:$0xff]
      %v366 = vld [vmem:[#allocation12 + $0x108] sm:$0xff]
      %v367 = vld [vmem:[#allocation12 + $0x110] sm:$0xff]
      %v368 = vld [vmem:[#allocation12 + $0x118] sm:$0xff]
      %v369 = vld [vmem:[#allocation12 + $0x120] sm:$0xff]
      %v370 = vld [vmem:[#allocation12 + $0x128] sm:$0xff]
      %v371 = vld [vmem:[#allocation12 + $0x130] sm:$0xff]
      %v372 = vld [vmem:[#allocation12 + $0x138] sm:$0xff]
      %v373 = vld [vmem:[#allocation12 + $0x140] sm:$0xff]
      %v374 = vld [vmem:[#allocation12 + $0x148] sm:$0xff]
      %v375 = vld [vmem:[#allocation12 + $0x150] sm:$0xff]
      %v376 = vld [vmem:[#allocation12 + $0x158] sm:$0xff]
      %v377 = vld [vmem:[#allocation12 + $0x160] sm:$0xff]
      %v378 = vld [vmem:[#allocation12 + $0x168] sm:$0xff]
      %v379 = vld [vmem:[#allocation12 + $0x170] sm:$0xff]
      %v380 = vld [vmem:[#allocation12 + $0x178] sm:$0xff]
      %v381 = vld [vmem:[#allocation12 + $0x180] sm:$0xff]
      %v382 = vld [vmem:[#allocation12 + $0x188] sm:$0xff]
      %384 = vst [vmem:[#allocation1] ss:$4 sm:$0xff] %v316
      %v385 = vld.sshfl [vmem:[#allocation1] sm:$0xff pattern:$0x73625140]
      %v386 = vld.sshfl [vmem:[#allocation1 + $0x8] sm:$0xff pattern:$0x73625140]
      %v387 = vld.sshfl [vmem:[#allocation1 + $0x10] sm:$0xff pattern:$0x73625140]
      %v388 = vld.sshfl [vmem:[#allocation1 + $0x18] sm:$0xff pattern:$0x73625140]
      %v392 = vsel %vm168, %v388, 0
      %394 = vmatpush.msra.mxu0 %v348
      %395 = vmatpush.msra.mxu0 %v347
      %396 = vmatpush.msra.mxu0 %v346
      %397 = vmatpush.msra.mxu0 %v345
      %398 = vmatpush.msra.mxu0 %v344
      %399 = vmatpush.msra.mxu0 %v343
      %400 = vmatpush.msra.mxu0 %v342
      %401 = vmatpush.msra.mxu0 %v341
      %402 = vmatpush.msra.mxu0 %v340
      %403 = vmatpush.msra.mxu0 %v339
      %404 = vmatpush.msra.mxu0 %v338
      %405 = vmatpush.msra.mxu0 %v337
      %406 = vmatpush.msra.mxu0 %v336
      %407 = vmatpush.msra.mxu0 %v335
      %408 = vmatpush.msra.mxu0 %v334
      %409 = vmatpush.msra.mxu0 %v333
      %410 = vmatmul.f32.gmra.mxu0 %v385
      %v411 = vpop.f32.mrf.mxu0
      %v412 = vadd.f32 0.0, %v411
      %413 = vdwg.mxu0
      %414 = vmatpush.msra.mxu0 %v364
      %415 = vmatpush.msra.mxu0 %v363
      %416 = vmatpush.msra.mxu0 %v362
      %417 = vmatpush.msra.mxu0 %v361
      %418 = vmatpush.msra.mxu0 %v360
      %419 = vmatpush.msra.mxu0 %v359
      %420 = vmatpush.msra.mxu0 %v358
      %421 = vmatpush.msra.mxu0 %v357
      %422 = vmatpush.msra.mxu0 %v356
      %423 = vmatpush.msra.mxu0 %v355
      %424 = vmatpush.msra.mxu0 %v354
      %425 = vmatpush.msra.mxu0 %v353
      %426 = vmatpush.msra.mxu0 %v352
      %427 = vmatpush.msra.mxu0 %v351
      %428 = vmatpush.msra.mxu0 %v350
      %429 = vmatpush.msra.mxu0 %v349
      %430 = vmatmul.f32.gmra.mxu0 %v386
      %v431 = vpop.f32.mrf.mxu0
      %v432 = vadd.f32 %v412, %v431
      %433 = vdwg.mxu0
      %434 = vmatpush.msra.mxu0 %v380
      %435 = vmatpush.msra.mxu0 %v379
      %436 = vmatpush.msra.mxu0 %v378
      %437 = vmatpush.msra.mxu0 %v377
      %438 = vmatpush.msra.mxu0 %v376
      %439 = vmatpush.msra.mxu0 %v375
      %440 = vmatpush.msra.mxu0 %v374
      %441 = vmatpush.msra.mxu0 %v373
      %442 = vmatpush.msra.mxu0 %v372
      %443 = vmatpush.msra.mxu0 %v371
      %444 = vmatpush.msra.mxu0 %v370
      %445 = vmatpush.msra.mxu0 %v369
      %446 = vmatpush.msra.mxu0 %v368
      %447 = vmatpush.msra.mxu0 %v367
      %448 = vmatpush.msra.mxu0 %v366
      %449 = vmatpush.msra.mxu0 %v365
      %450 = vmatmul.f32.gmra.mxu0 %v387
      %v451 = vpop.f32.mrf.mxu0
      %v452 = vadd.f32 %v432, %v451
      %453 = vdwg.mxu0
      %454 = vmatpush.msra.mxu0 0.0
      %455 = vmatpush.msra.mxu0 0.0
      %456 = vmatpush.msra.mxu0 0.0
      %457 = vmatpush.msra.mxu0 0.0
      %458 = vmatpush.msra.mxu0 0.0
      %459 = vmatpush.msra.mxu0 0.0
      %460 = vmatpush.msra.mxu0 0.0
      %461 = vmatpush.msra.mxu0 0.0
      %462 = vmatpush.msra.mxu0 0.0
      %463 = vmatpush.msra.mxu0 0.0
      %464 = vmatpush.msra.mxu0 0.0
      %465 = vmatpush.msra.mxu0 0.0
      %466 = vmatpush.msra.mxu0 0.0
      %467 = vmatpush.msra.mxu0 0.0
      %468 = vmatpush.msra.mxu0 %v382
      %469 = vmatpush.msra.mxu0 %v381
      %470 = vmatmul.f32.gmra.mxu0 %v392
      %v471 = vpop.f32.mrf.mxu0
      %v472 = vadd.f32 %v452, %v471
      %473 = vdwg.mxu0
      %474 = vmatpush.msra.mxu0 %v332
      %475 = vmatpush.msra.mxu0 %v331
      %476 = vmatpush.msra.mxu0 %v330
      %477 = vmatpush.msra.mxu0 %v329
      %478 = vmatpush.msra.mxu0 %v328
      %479 = vmatpush.msra.mxu0 %v327
      %480 = vmatpush.msra.mxu0 %v326
      %481 = vmatpush.msra.mxu0 %v325
      %482 = vmatpush.msra.mxu0 %v324
      %483 = vmatpush.msra.mxu0 %v323
      %484 = vmatpush.msra.mxu0 %v322
      %485 = vmatpush.msra.mxu0 %v321
      %486 = vmatpush.msra.mxu0 %v320
      %487 = vmatpush.msra.mxu0 %v319
      %488 = vmatpush.msra.mxu0 %v318
      %489 = vmatpush.msra.mxu0 %v317
      %490 = vmatmul.f32.gmra.mxu0 %v314
      %v491 = vpop.f32.mrf.mxu0
      %v492 = vadd.f32 %v472, %v491
      %493 = vdwg.mxu0
      %v494 = vld [vmem:[%s5] sm:$0x1]
      %v496 = vperm.slane %v494, 0
      %v498 = vadd.f32 %v492, %v496
      %499 = vst [vmem:[#allocation13] sm:$0x3] %v498
    $region53: #{tpu_custom_call.1} parent=1 // pred_fallthru
      _
    // Predicated region
    $region54: #{tpu_custom_call.1} parent=1 // pred_check
      _
    $region55: #{tpu_custom_call.1} parent=1 // pred_check_branch
      %501 = sbr.rel (0) target = $region57
    $region56: #{tpu_custom_call.1} parent=1 // pred_region
      %503 = vsyncadd [#allocation6], 0
      %s505 = sshll.u32 [#allocation13], 4
      %s506 = int_to_ptr.vmem [resolvable:$true] %s505
      %s507 = sshll.u32 %s6, 4
      %s508 = int_to_ptr.hbm [resolvable:$true] %s507
      %510 = dma.vmem_to_hbm [thread:$0]  %s506, 32, %s508, [#allocation6]
    $region57: #{tpu_custom_call.1} parent=1 // pred_fallthru
      _
    // Predicated region
    $region58: #{tpu_custom_call.1} parent=1 // pred_check
      _
    $region59: #{tpu_custom_call.1} parent=1 // pred_check_branch
      %512 = sbr.rel (0) target = $region61
    $region60: #{tpu_custom_call.1} parent=1 // pred_region
      %514 = dma.done [#allocation6], 32
    $region61: #{tpu_custom_call.1} parent=1 // pred_fallthru
      _
    %515 = vsyncpa [#allocation5], 1
    %516 = vsyncpa [#allocation8], 1
    %517 = vsyncpa [#allocation11], 1
    %518 = vsyncpa [#allocation6], 1

</llo_original>
